<compile_context>
chip_gen: v5e
topology: v5e:2x2
jax: 0.10.0
libtpu: 0.0.40
codegen_flags: <defaults>
</compile_context>

<pallas_src>
import functools

import jax
import jax.numpy as jnp
from jax.experimental import pallas as pl
from jax.experimental.pallas import tpu as pltpu

EPS = 1e-5


def _instance_norm(y):
    """Per-channel normalization over the flattened spatial axis (single pass).

    Biased variance (nn.InstanceNorm2d default), f32 accumulation, EUP rsqrt.
    """
    inv_hw = 1.0 / y.shape[-1]
    s = jnp.sum(y, axis=-1, keepdims=True)
    sq = jnp.sum(y * y, axis=-1, keepdims=True)
    m = s * inv_hw
    var = jnp.maximum(sq * inv_hw - m * m, 0.0)
    return (y - m) * jax.lax.rsqrt(var + EPS)


def _resblock_kernel(x_ref, w1_ref, w2_ref, o_ref, pad_ref, *, H, W, PAD, K_pad):
    HW = H * W
    Cp = x_ref.shape[1]

    x = x_ref[0].astype(jnp.float32)              # (Cp, HW)
    w1 = w1_ref[...].astype(jnp.float32)          # (Cp, K_pad)
    w2 = w2_ref[...].astype(jnp.float32)

    # Zero the left/right halo strips of the line buffer (the center is fully
    # overwritten before every use, so only the halos need clearing).
    halo = jnp.zeros((Cp, PAD), jnp.float32)
    pad_ref[:, :PAD] = halo
    pad_ref[:, PAD + HW:] = halo

    # Column-wrap masks, built once and reused by both convolutions.
    col = jax.lax.broadcasted_iota(jnp.int32, (1, HW), 1) % W
    m_left = col >= 1          # valid source for dw == -1
    m_right = col < W - 1      # valid source for dw == +1

    n_zero = K_pad - 9 * Cp    # zero rows padding the contraction dim to 128k

    def conv3x3(act, w2d):
        # act: (Cp, HW) f32 -> (Cp, HW) f32 via one MXU matmul of depth K_pad.
        pad_ref[:, PAD:PAD + HW] = act            # aligned store into line buf
        parts = []
        for k in range(9):
            dh, dw = k // 3 - 1, k % 3 - 1
            part = pad_ref[:, pl.ds(PAD + dh * W + dw, HW)]
            if dw == -1:
                part = jnp.where(m_left, part, 0.0)
            elif dw == 1:
                part = jnp.where(m_right, part, 0.0)
            parts.append(part)                    # row borders zeroed by halos
        if n_zero:
            parts.append(jnp.zeros((n_zero, HW), jnp.float32))
        stack = jnp.concatenate(parts, axis=0)    # (K_pad, HW), 8-aligned rows
        return jnp.dot(w2d, stack, preferred_element_type=jnp.float32)

    # conv1 -> InstanceNorm -> ReLU
    y = jnp.maximum(_instance_norm(conv3x3(x, w1)), 0.0)
    # conv2 -> InstanceNorm
    y = _instance_norm(conv3x3(y, w2))
    # residual add
    o_ref[0] = (x + y).astype(o_ref.dtype)


def _pack_weight(w, C, Cp, Kp):
    """OIHW (C,C,3,3) -> dense 2-D tile (Cp, Kp) with W2d[o, k*Cp + i]."""
    w_t = jnp.transpose(w, (2, 3, 0, 1)).reshape(9, C, C)       # [k, o, i]
    w_pad = jnp.zeros((9, Cp, Cp), w.dtype).at[:, :C, :C].set(w_t)
    w2d = jnp.transpose(w_pad, (1, 0, 2)).reshape(Cp, 9 * Cp)
    if Kp > 9 * Cp:
        w2d = jnp.pad(w2d, ((0, 0), (0, Kp - 9 * Cp)))
    return w2d


def residual_block(x, w1, w2):
    """x: (N, C, H, W); w1, w2: (C, C, 3, 3) (PyTorch OIHW layout)."""
    N, C, H, W = x.shape
    HW = H * W
    Cp = ((C + 7) // 8) * 8                       # sublane-align channels
    Kp = ((9 * Cp + 127) // 128) * 128            # lane-align contraction dim
    PAD = (((W + 1) + 127) // 128) * 128          # halo width (>= W+1, aligned)

    x_flat = jnp.zeros((N, Cp, HW), x.dtype).at[:, :C, :].set(x.reshape(N, C, HW))
    w1r = _pack_weight(w1, C, Cp, Kp)
    w2r = _pack_weight(w2, C, Cp, Kp)

    out = pl.pallas_call(
        functools.partial(_resblock_kernel, H=H, W=W, PAD=PAD, K_pad=Kp),
        out_shape=jax.ShapeDtypeStruct((N, Cp, HW), x.dtype),
        grid_spec=pltpu.PrefetchScalarGridSpec(
            num_scalar_prefetch=0,
            grid=(N,),
            in_specs=[
                pl.BlockSpec((1, Cp, HW), lambda n: (n, 0, 0)),
                pl.BlockSpec((Cp, Kp), lambda n: (0, 0)),
                pl.BlockSpec((Cp, Kp), lambda n: (0, 0)),
            ],
            out_specs=pl.BlockSpec((1, Cp, HW), lambda n: (n, 0, 0)),
            scratch_shapes=[pltpu.VMEM((Cp, HW + 2 * PAD), jnp.float32)],
        ),
        compiler_params=pltpu.CompilerParams(
            dimension_semantics=("parallel",)),
    )(x_flat, w1r, w2r)

    return out[:, :C, :].reshape(N, C, H, W)


def residual_block_ref(x, w1, w2):
    # Pure-JAX reference (mirrors the PyTorch forward) for the correctness check.
    dn = jax.lax.conv_dimension_numbers(x.shape, w1.shape, ("NCHW", "OIHW", "NCHW"))

    def conv(z, w):
        return jax.lax.conv_general_dilated(
            z, w, window_strides=(1, 1), padding=((1, 1), (1, 1)),
            dimension_numbers=dn, precision=jax.lax.Precision.HIGHEST)

    def inorm(z):
        m = z.mean(axis=(2, 3), keepdims=True)
        v = ((z - m) ** 2).mean(axis=(2, 3), keepdims=True)
        return (z - m) * jax.lax.rsqrt(v + EPS)

    y = jnp.maximum(inorm(conv(x, w1)), 0.0)
    y = inorm(conv(y, w2))
    return x + y


if __name__ == "__main__":
    key = jax.random.PRNGKey(0)
    kx, k1, k2 = jax.random.split(key, 3)
    N, C, H, W = 2, 4, 16, 16

    x = jax.random.normal(kx, (N, C, H, W), dtype=jnp.float32)
    fan_in = C * 3 * 3  # Kaiming-style deterministic init (no checkpoint load)
    w1 = jax.random.normal(k1, (C, C, 3, 3), dtype=jnp.float32) * (2.0 / fan_in) ** 0.5
    w2 = jax.random.normal(k2, (C, C, 3, 3), dtype=jnp.float32) * (2.0 / fan_in) ** 0.5

    out = jax.block_until_ready(residual_block(x, w1, w2))
    ref = residual_block_ref(x, w1, w2)

    assert out.shape == (N, C, H, W) and out.dtype == x.dtype
    err = float(jnp.max(jnp.abs(out - ref)))
    # Tolerance covers the default-precision (bf16-pass) MXU path vs f32 reference.
    assert jnp.allclose(out, ref, atol=5e-2, rtol=5e-2), f"max abs err {err}"
    print("KERNEL_OK")
</pallas_src>

<mosaic_0001>
module attributes {stable_mosaic.version = 11 : i64} {
  func.func @_resblock_kernel(%arg0: i32, %arg1: memref<1x8x256xf32, #tpu.memory_space<vmem>>, %arg2: memref<8x128xf32, #tpu.memory_space<vmem>>, %arg3: memref<8x128xf32, #tpu.memory_space<vmem>>, %arg4: memref<1x8x256xf32, #tpu.memory_space<vmem>>, %arg5: memref<8x512xf32, #tpu.memory_space<vmem>>) attributes {dimension_semantics = [#tpu.dimension_semantics<parallel>], iteration_bounds = array<i64: 2>, scalar_prefetch = 0 : i64, scratch_operands = 1 : i64, tpu.core_type = #tpu.core_type<tc>, window_params = [{transform_indices = @transform_0, window_bounds = array<i64: 1, 8, 256>}, {pipeline_mode = #tpu.pipeline_mode<synchronous>, transform_indices = @transform_1, window_bounds = array<i64: 8, 128>}, {pipeline_mode = #tpu.pipeline_mode<synchronous>, transform_indices = @transform_2, window_bounds = array<i64: 8, 128>}, {transform_indices = @transform_3, window_bounds = array<i64: 1, 8, 256>}]} {
    %c0 = arith.constant 0 : index
    %c0_0 = arith.constant 0 : index
    %c0_1 = arith.constant 0 : index
    %0 = vector.load %arg1[%c0, %c0_0, %c0_1] : memref<1x8x256xf32, #tpu.memory_space<vmem>>, vector<1x8x256xf32>
    %1 = vector.shape_cast %0 : vector<1x8x256xf32> to vector<8x256xf32>
    %c0_2 = arith.constant 0 : index
    %c0_3 = arith.constant 0 : index
    %2 = vector.load %arg2[%c0_2, %c0_3] : memref<8x128xf32, #tpu.memory_space<vmem>>, vector<8x128xf32>
    %c0_4 = arith.constant 0 : index
    %c0_5 = arith.constant 0 : index
    %3 = vector.load %arg3[%c0_4, %c0_5] : memref<8x128xf32, #tpu.memory_space<vmem>>, vector<8x128xf32>
    %cst = arith.constant 0.000000e+00 : f32
    %4 = vector.broadcast %cst : f32 to vector<8x128xf32>
    %c0_6 = arith.constant 0 : index
    %c0_7 = arith.constant 0 : index
    %5 = vector.load %arg5[%c0_6, %c0_7] : memref<8x512xf32, #tpu.memory_space<vmem>>, vector<8x128xf32>
    tpu.vector_store %arg5[%c0_6, %c0_7], %4 {strides = array<i32>} : memref<8x512xf32, #tpu.memory_space<vmem>>, vector<8x128xf32>,
    %c0_8 = arith.constant 0 : index
    %c384 = arith.constant 384 : index
    %6 = vector.load %arg5[%c0_8, %c384] : memref<8x512xf32, #tpu.memory_space<vmem>>, vector<8x128xf32>
    tpu.vector_store %arg5[%c0_8, %c384], %4 {strides = array<i32>} : memref<8x512xf32, #tpu.memory_space<vmem>>, vector<8x128xf32>,
    %7 = tpu.iota {dimensions = array<i32: 1>} : vector<1x256xi32>
    %c16_i32 = arith.constant 16 : i32
    %c0_i32 = arith.constant 0 : i32
    %8 = arith.cmpi eq, %c16_i32, %c0_i32 : i32
    %c1_i32 = arith.constant 1 : i32
    %9 = arith.select %8, %c1_i32, %c16_i32 : i32
    %10 = vector.broadcast %9 : i32 to vector<1x256xi32>
    %11 = arith.remsi %7, %10 : vector<1x256xi32>
    %c0_i32_9 = arith.constant 0 : i32
    %12 = vector.broadcast %c0_i32_9 : i32 to vector<1x256xi32>
    %13 = arith.cmpi ne, %11, %12 : vector<1x256xi32>
    %c0_i32_10 = arith.constant 0 : i32
    %14 = vector.broadcast %c0_i32_10 : i32 to vector<1x256xi32>
    %15 = arith.cmpi slt, %11, %14 : vector<1x256xi32>
    %c0_i32_11 = arith.constant 0 : i32
    %16 = arith.cmpi slt, %9, %c0_i32_11 : i32
    %17 = vector.broadcast %16 : i1 to vector<1x256xi1>
    %18 = vector.broadcast %17 : vector<1x256xi1> to vector<1x256xi1>
    %19 = arith.xori %15, %18 : vector<1x256xi1>
    %20 = arith.andi %19, %13 : vector<1x256xi1>
    %21 = vector.broadcast %9 : i32 to vector<1x256xi32>
    %22 = arith.addi %11, %21 : vector<1x256xi32>
    %23 = arith.select %20, %22, %11 : vector<1x256xi1>, vector<1x256xi32>
    %c1_i32_12 = arith.constant 1 : i32
    %24 = vector.broadcast %c1_i32_12 : i32 to vector<1x256xi32>
    %25 = arith.cmpi sge, %23, %24 : vector<1x256xi32>
    %c15_i32 = arith.constant 15 : i32
    %26 = vector.broadcast %c15_i32 : i32 to vector<1x256xi32>
    %27 = arith.cmpi slt, %23, %26 : vector<1x256xi32>
    %c0_13 = arith.constant 0 : index
    %c128 = arith.constant 128 : index
    %28 = vector.load %arg5[%c0_13, %c128] : memref<8x512xf32, #tpu.memory_space<vmem>>, vector<8x256xf32>
    tpu.vector_store %arg5[%c0_13, %c128], %1 {strides = array<i32>} : memref<8x512xf32, #tpu.memory_space<vmem>>, vector<8x256xf32>,
    %c0_14 = arith.constant 0 : index
    %c111 = arith.constant 111 : index
    %29 = vector.load %arg5[%c0_14, %c111] : memref<8x512xf32, #tpu.memory_space<vmem>>, vector<8x256xf32>
    %cst_15 = arith.constant 0.000000e+00 : f32
    %30 = vector.shape_cast %25 : vector<1x256xi1> to vector<1x256xi1>
    %31 = vector.broadcast %30 : vector<1x256xi1> to vector<8x256xi1>
    %32 = vector.broadcast %cst_15 : f32 to vector<8x256xf32>
    %33 = arith.select %31, %29, %32 : vector<8x256xi1>, vector<8x256xf32>
    %c0_16 = arith.constant 0 : index
    %c112 = arith.constant 112 : index
    %34 = vector.load %arg5[%c0_16, %c112] : memref<8x512xf32, #tpu.memory_space<vmem>>, vector<8x256xf32>
    %c0_17 = arith.constant 0 : index
    %c113 = arith.constant 113 : index
    %35 = vector.load %arg5[%c0_17, %c113] : memref<8x512xf32, #tpu.memory_space<vmem>>, vector<8x256xf32>
    %cst_18 = arith.constant 0.000000e+00 : f32
    %36 = vector.shape_cast %27 : vector<1x256xi1> to vector<1x256xi1>
    %37 = vector.broadcast %36 : vector<1x256xi1> to vector<8x256xi1>
    %38 = vector.broadcast %cst_18 : f32 to vector<8x256xf32>
    %39 = arith.select %37, %35, %38 : vector<8x256xi1>, vector<8x256xf32>
    %c0_19 = arith.constant 0 : index
    %c127 = arith.constant 127 : index
    %40 = vector.load %arg5[%c0_19, %c127] : memref<8x512xf32, #tpu.memory_space<vmem>>, vector<8x256xf32>
    %cst_20 = arith.constant 0.000000e+00 : f32
    %41 = vector.shape_cast %25 : vector<1x256xi1> to vector<1x256xi1>
    %42 = vector.broadcast %41 : vector<1x256xi1> to vector<8x256xi1>
    %43 = vector.broadcast %cst_20 : f32 to vector<8x256xf32>
    %44 = arith.select %42, %40, %43 : vector<8x256xi1>, vector<8x256xf32>
    %c0_21 = arith.constant 0 : index
    %c128_22 = arith.constant 128 : index
    %45 = vector.load %arg5[%c0_21, %c128_22] : memref<8x512xf32, #tpu.memory_space<vmem>>, vector<8x256xf32>
    %c0_23 = arith.constant 0 : index
    %c129 = arith.constant 129 : index
    %46 = vector.load %arg5[%c0_23, %c129] : memref<8x512xf32, #tpu.memory_space<vmem>>, vector<8x256xf32>
    %cst_24 = arith.constant 0.000000e+00 : f32
    %47 = vector.shape_cast %27 : vector<1x256xi1> to vector<1x256xi1>
    %48 = vector.broadcast %47 : vector<1x256xi1> to vector<8x256xi1>
    %49 = vector.broadcast %cst_24 : f32 to vector<8x256xf32>
    %50 = arith.select %48, %46, %49 : vector<8x256xi1>, vector<8x256xf32>
    %c0_25 = arith.constant 0 : index
    %c143 = arith.constant 143 : index
    %51 = vector.load %arg5[%c0_25, %c143] : memref<8x512xf32, #tpu.memory_space<vmem>>, vector<8x256xf32>
    %cst_26 = arith.constant 0.000000e+00 : f32
    %52 = vector.shape_cast %25 : vector<1x256xi1> to vector<1x256xi1>
    %53 = vector.broadcast %52 : vector<1x256xi1> to vector<8x256xi1>
    %54 = vector.broadcast %cst_26 : f32 to vector<8x256xf32>
    %55 = arith.select %53, %51, %54 : vector<8x256xi1>, vector<8x256xf32>
    %c0_27 = arith.constant 0 : index
    %c144 = arith.constant 144 : index
    %56 = vector.load %arg5[%c0_27, %c144] : memref<8x512xf32, #tpu.memory_space<vmem>>, vector<8x256xf32>
    %c0_28 = arith.constant 0 : index
    %c145 = arith.constant 145 : index
    %57 = vector.load %arg5[%c0_28, %c145] : memref<8x512xf32, #tpu.memory_space<vmem>>, vector<8x256xf32>
    %cst_29 = arith.constant 0.000000e+00 : f32
    %58 = vector.shape_cast %27 : vector<1x256xi1> to vector<1x256xi1>
    %59 = vector.broadcast %58 : vector<1x256xi1> to vector<8x256xi1>
    %60 = vector.broadcast %cst_29 : f32 to vector<8x256xf32>
    %61 = arith.select %59, %57, %60 : vector<8x256xi1>, vector<8x256xf32>
    %cst_30 = arith.constant 0.000000e+00 : f32
    %62 = vector.broadcast %cst_30 : f32 to vector<56x256xf32>
    %63 = tpu.concatenate %33, %34, %39, %44, %45, %50, %55, %56, %61, %62 in 0 : vector<8x256xf32>, vector<8x256xf32>, vector<8x256xf32>, vector<8x256xf32>, vector<8x256xf32>, vector<8x256xf32>, vector<8x256xf32>, vector<8x256xf32>, vector<8x256xf32>, vector<56x256xf32> -> vector<128x256xf32>
    %cst_31 = arith.constant dense<0.000000e+00> : vector<8x256xf32>
    %64 = tpu.matmul %2, %63, %cst_31 {dimension_numbers = #tpu.dot_dimension_numbers<[1], [0], [0], [1], [0, 0, 1, 1], [], []>} : vector<8x128xf32>, vector<128x256xf32>, vector<8x256xf32> -> vector<8x256xf32>
    %cst_32 = arith.constant dense<0.000000e+00> : vector<8xf32>
    %65 = vector.multi_reduction <add>, %64, %cst_32 [1] : vector<8x256xf32> to vector<8xf32>
    %66 = vector.shape_cast %65 : vector<8xf32> to vector<8x1xf32>
    %67 = arith.mulf %64, %64 : vector<8x256xf32>
    %cst_33 = arith.constant dense<0.000000e+00> : vector<8xf32>
    %68 = vector.multi_reduction <add>, %67, %cst_33 [1] : vector<8x256xf32> to vector<8xf32>
    %69 = vector.shape_cast %68 : vector<8xf32> to vector<8x1xf32>
    %cst_34 = arith.constant 3.906250e-03 : f32
    %70 = vector.broadcast %cst_34 : f32 to vector<8x1xf32>
    %71 = arith.mulf %66, %70 : vector<8x1xf32>
    %cst_35 = arith.constant 3.906250e-03 : f32
    %72 = vector.broadcast %cst_35 : f32 to vector<8x1xf32>
    %73 = arith.mulf %69, %72 : vector<8x1xf32>
    %74 = arith.mulf %71, %71 : vector<8x1xf32>
    %75 = arith.subf %73, %74 : vector<8x1xf32>
    %cst_36 = arith.constant 0.000000e+00 : f32
    %76 = vector.broadcast %cst_36 : f32 to vector<8x1xf32>
    %77 = arith.maximumf %75, %76 : vector<8x1xf32>
    %78 = vector.broadcast %71 : vector<8x1xf32> to vector<8x256xf32>
    %79 = arith.subf %64, %78 : vector<8x256xf32>
    %cst_37 = arith.constant 9.99999974E-6 : f32
    %80 = vector.broadcast %cst_37 : f32 to vector<8x1xf32>
    %81 = arith.addf %77, %80 : vector<8x1xf32>
    %82 = math.rsqrt %81 : vector<8x1xf32>
    %83 = vector.broadcast %82 : vector<8x1xf32> to vector<8x256xf32>
    %84 = arith.mulf %79, %83 : vector<8x256xf32>
    %cst_38 = arith.constant 0.000000e+00 : f32
    %85 = vector.broadcast %cst_38 : f32 to vector<8x256xf32>
    %86 = arith.maximumf %84, %85 : vector<8x256xf32>
    %c0_39 = arith.constant 0 : index
    %c128_40 = arith.constant 128 : index
    %87 = vector.load %arg5[%c0_39, %c128_40] : memref<8x512xf32, #tpu.memory_space<vmem>>, vector<8x256xf32>
    tpu.vector_store %arg5[%c0_39, %c128_40], %86 {strides = array<i32>} : memref<8x512xf32, #tpu.memory_space<vmem>>, vector<8x256xf32>,
    %c0_41 = arith.constant 0 : index
    %c111_42 = arith.constant 111 : index
    %88 = vector.load %arg5[%c0_41, %c111_42] : memref<8x512xf32, #tpu.memory_space<vmem>>, vector<8x256xf32>
    %cst_43 = arith.constant 0.000000e+00 : f32
    %89 = vector.shape_cast %25 : vector<1x256xi1> to vector<1x256xi1>
    %90 = vector.broadcast %89 : vector<1x256xi1> to vector<8x256xi1>
    %91 = vector.broadcast %cst_43 : f32 to vector<8x256xf32>
    %92 = arith.select %90, %88, %91 : vector<8x256xi1>, vector<8x256xf32>
    %c0_44 = arith.constant 0 : index
    %c112_45 = arith.constant 112 : index
    %93 = vector.load %arg5[%c0_44, %c112_45] : memref<8x512xf32, #tpu.memory_space<vmem>>, vector<8x256xf32>
    %c0_46 = arith.constant 0 : index
    %c113_47 = arith.constant 113 : index
    %94 = vector.load %arg5[%c0_46, %c113_47] : memref<8x512xf32, #tpu.memory_space<vmem>>, vector<8x256xf32>
    %cst_48 = arith.constant 0.000000e+00 : f32
    %95 = vector.shape_cast %27 : vector<1x256xi1> to vector<1x256xi1>
    %96 = vector.broadcast %95 : vector<1x256xi1> to vector<8x256xi1>
    %97 = vector.broadcast %cst_48 : f32 to vector<8x256xf32>
    %98 = arith.select %96, %94, %97 : vector<8x256xi1>, vector<8x256xf32>
    %c0_49 = arith.constant 0 : index
    %c127_50 = arith.constant 127 : index
    %99 = vector.load %arg5[%c0_49, %c127_50] : memref<8x512xf32, #tpu.memory_space<vmem>>, vector<8x256xf32>
    %cst_51 = arith.constant 0.000000e+00 : f32
    %100 = vector.shape_cast %25 : vector<1x256xi1> to vector<1x256xi1>
    %101 = vector.broadcast %100 : vector<1x256xi1> to vector<8x256xi1>
    %102 = vector.broadcast %cst_51 : f32 to vector<8x256xf32>
    %103 = arith.select %101, %99, %102 : vector<8x256xi1>, vector<8x256xf32>
    %c0_52 = arith.constant 0 : index
    %c128_53 = arith.constant 128 : index
    %104 = vector.load %arg5[%c0_52, %c128_53] : memref<8x512xf32, #tpu.memory_space<vmem>>, vector<8x256xf32>
    %c0_54 = arith.constant 0 : index
    %c129_55 = arith.constant 129 : index
    %105 = vector.load %arg5[%c0_54, %c129_55] : memref<8x512xf32, #tpu.memory_space<vmem>>, vector<8x256xf32>
    %cst_56 = arith.constant 0.000000e+00 : f32
    %106 = vector.shape_cast %27 : vector<1x256xi1> to vector<1x256xi1>
    %107 = vector.broadcast %106 : vector<1x256xi1> to vector<8x256xi1>
    %108 = vector.broadcast %cst_56 : f32 to vector<8x256xf32>
    %109 = arith.select %107, %105, %108 : vector<8x256xi1>, vector<8x256xf32>
    %c0_57 = arith.constant 0 : index
    %c143_58 = arith.constant 143 : index
    %110 = vector.load %arg5[%c0_57, %c143_58] : memref<8x512xf32, #tpu.memory_space<vmem>>, vector<8x256xf32>
    %cst_59 = arith.constant 0.000000e+00 : f32
    %111 = vector.shape_cast %25 : vector<1x256xi1> to vector<1x256xi1>
    %112 = vector.broadcast %111 : vector<1x256xi1> to vector<8x256xi1>
    %113 = vector.broadcast %cst_59 : f32 to vector<8x256xf32>
    %114 = arith.select %112, %110, %113 : vector<8x256xi1>, vector<8x256xf32>
    %c0_60 = arith.constant 0 : index
    %c144_61 = arith.constant 144 : index
    %115 = vector.load %arg5[%c0_60, %c144_61] : memref<8x512xf32, #tpu.memory_space<vmem>>, vector<8x256xf32>
    %c0_62 = arith.constant 0 : index
    %c145_63 = arith.constant 145 : index
    %116 = vector.load %arg5[%c0_62, %c145_63] : memref<8x512xf32, #tpu.memory_space<vmem>>, vector<8x256xf32>
    %cst_64 = arith.constant 0.000000e+00 : f32
    %117 = vector.shape_cast %27 : vector<1x256xi1> to vector<1x256xi1>
    %118 = vector.broadcast %117 : vector<1x256xi1> to vector<8x256xi1>
    %119 = vector.broadcast %cst_64 : f32 to vector<8x256xf32>
    %120 = arith.select %118, %116, %119 : vector<8x256xi1>, vector<8x256xf32>
    %cst_65 = arith.constant 0.000000e+00 : f32
    %121 = vector.broadcast %cst_65 : f32 to vector<56x256xf32>
    %122 = tpu.concatenate %92, %93, %98, %103, %104, %109, %114, %115, %120, %121 in 0 : vector<8x256xf32>, vector<8x256xf32>, vector<8x256xf32>, vector<8x256xf32>, vector<8x256xf32>, vector<8x256xf32>, vector<8x256xf32>, vector<8x256xf32>, vector<8x256xf32>, vector<56x256xf32> -> vector<128x256xf32>
    %cst_66 = arith.constant dense<0.000000e+00> : vector<8x256xf32>
    %123 = tpu.matmul %3, %122, %cst_66 {dimension_numbers = #tpu.dot_dimension_numbers<[1], [0], [0], [1], [0, 0, 1, 1], [], []>} : vector<8x128xf32>, vector<128x256xf32>, vector<8x256xf32> -> vector<8x256xf32>
    %cst_67 = arith.constant dense<0.000000e+00> : vector<8xf32>
    %124 = vector.multi_reduction <add>, %123, %cst_67 [1] : vector<8x256xf32> to vector<8xf32>
    %125 = vector.shape_cast %124 : vector<8xf32> to vector<8x1xf32>
    %126 = arith.mulf %123, %123 : vector<8x256xf32>
    %cst_68 = arith.constant dense<0.000000e+00> : vector<8xf32>
    %127 = vector.multi_reduction <add>, %126, %cst_68 [1] : vector<8x256xf32> to vector<8xf32>
    %128 = vector.shape_cast %127 : vector<8xf32> to vector<8x1xf32>
    %cst_69 = arith.constant 3.906250e-03 : f32
    %129 = vector.broadcast %cst_69 : f32 to vector<8x1xf32>
    %130 = arith.mulf %125, %129 : vector<8x1xf32>
    %cst_70 = arith.constant 3.906250e-03 : f32
    %131 = vector.broadcast %cst_70 : f32 to vector<8x1xf32>
    %132 = arith.mulf %128, %131 : vector<8x1xf32>
    %133 = arith.mulf %130, %130 : vector<8x1xf32>
    %134 = arith.subf %132, %133 : vector<8x1xf32>
    %cst_71 = arith.constant 0.000000e+00 : f32
    %135 = vector.broadcast %cst_71 : f32 to vector<8x1xf32>
    %136 = arith.maximumf %134, %135 : vector<8x1xf32>
    %137 = vector.broadcast %130 : vector<8x1xf32> to vector<8x256xf32>
    %138 = arith.subf %123, %137 : vector<8x256xf32>
    %cst_72 = arith.constant 9.99999974E-6 : f32
    %139 = vector.broadcast %cst_72 : f32 to vector<8x1xf32>
    %140 = arith.addf %136, %139 : vector<8x1xf32>
    %141 = math.rsqrt %140 : vector<8x1xf32>
    %142 = vector.broadcast %141 : vector<8x1xf32> to vector<8x256xf32>
    %143 = arith.mulf %138, %142 : vector<8x256xf32>
    %144 = arith.addf %1, %143 : vector<8x256xf32>
    %c0_73 = arith.constant 0 : index
    %c0_74 = arith.constant 0 : index
    %c0_75 = arith.constant 0 : index
    %145 = vector.load %arg4[%c0_73, %c0_74, %c0_75] : memref<1x8x256xf32, #tpu.memory_space<vmem>>, vector<1x8x256xf32>
    %146 = vector.shape_cast %145 : vector<1x8x256xf32> to vector<8x256xf32>
    %147 = vector.shape_cast %144 : vector<8x256xf32> to vector<1x8x256xf32>
    tpu.vector_store %arg4[%c0_73, %c0_74, %c0_75], %147 {strides = array<i32>} : memref<1x8x256xf32, #tpu.memory_space<vmem>>, vector<1x8x256xf32>,
    return
  }
  func.func @transform_0(%arg0: i32) -> (i32, i32, i32) {
    %c0_i32 = arith.constant 0 : i32
    %c0_i32_0 = arith.constant 0 : i32
    %c0_i32_1 = arith.constant 0 : i32
    return %arg0, %c0_i32, %c0_i32_0 : i32, i32, i32
  }
  func.func @transform_1(%arg0: i32) -> (i32, i32) {
    %c0_i32 = arith.constant 0 : i32
    %c0_i32_0 = arith.constant 0 : i32
    %c0_i32_1 = arith.constant 0 : i32
    return %c0_i32, %c0_i32_0 : i32, i32
  }
  func.func @transform_2(%arg0: i32) -> (i32, i32) {
    %c0_i32 = arith.constant 0 : i32
    %c0_i32_0 = arith.constant 0 : i32
    %c0_i32_1 = arith.constant 0 : i32
    return %c0_i32, %c0_i32_0 : i32, i32
  }
  func.func @transform_3(%arg0: i32) -> (i32, i32, i32) {
    %c0_i32 = arith.constant 0 : i32
    %c0_i32_0 = arith.constant 0 : i32
    %c0_i32_1 = arith.constant 0 : i32
    return %arg0, %c0_i32, %c0_i32_0 : i32, i32, i32
  }
}

</mosaic_0001>

<llo_original>
// kernel: tpu_custom_call.1
$region0: #{tpu_custom_call.1}
  #allocation0 [shape = 'u32[]', space=smem, size = 0x4, offset = 0x4, fixed_abs, tag = 'smem constant byte address 0x4 - core index']
  #allocation1 [shape = 'u32[72,128]{1,0:T(1,128)}', space=vmem, size = 0x9000, scoped, tag = 'internal scratch']
  #allocation2 [shape = 'f32[8,512]{1,0:T(8,128)}', space=vmem, size = 0x4000, scoped, tag = 'scratch operand']
  %s0 = inlined_call_operand.hbm [shape: f32[2,8,256], index: 0, kind: input, shape index: {}]
  %s1 = inlined_call_operand.hbm [shape: f32[8,128], index: 1, kind: input, shape index: {}]
  %s2 = inlined_call_operand.hbm [shape: f32[8,128], index: 2, kind: input, shape index: {}]
  %s3 = inlined_call_operand.hbm [shape: f32[2,8,256], index: 3, kind: output, shape index: {}]
  %s4 = sld [smem:[#allocation0]]
  $region57: #{tpu_custom_call.1} parent=0
    _
  %s6 = ssub.s32 1, %s4
  %s7 = scalar_select 0, %s6, %s4
  $region1: #{tpu_custom_call.1} parent=0
    #allocation3 [shape = 'u8[16384]{0}', space=vmem, size = 0x4000, scoped, tag = 'input window, operand 0']
    #allocation4 [shape = 's32[2]{0}', space=sflag, size = 0x8, scoped, tag = 'scoped memory for tpu_custom_call.1']
    #allocation5 [shape = 's32[2]{0}', space=sflag, size = 0x8, scoped, tag = 'scoped memory for tpu_custom_call.1']
    #allocation6 [shape = 'u8[4096]{0}', space=vmem, size = 0x1000, scoped, tag = 'input window, operand 1, single buffered']
    #allocation7 [shape = 's32[1]{0}', space=sflag, size = 0x4, scoped, tag = 'scoped memory for tpu_custom_call.1']
    #allocation8 [shape = 'u8[4096]{0}', space=vmem, size = 0x1000, scoped, tag = 'input window, operand 2, single buffered']
    #allocation9 [shape = 'u8[16384]{0}', space=vmem, size = 0x4000, scoped, tag = 'output window, operand 0']
    %8 = vsyncpa [#allocation4], 0
    %s9 = scalar_lea.sflag [#allocation4], 1
    %10 = vsyncpa %s9, 0
    %11 = vsyncpa [#allocation7], 0
    %12 = vsyncpa [#allocation5], 0
    %s13 = scalar_lea.sflag [#allocation5], 1
    %14 = vsyncpa %s13, 0
    loop: start=0, step=1, limit=4
    $region2: #{tpu_custom_call.1} parent=1 // loop_pre_header
      _
    $region3: #{tpu_custom_call.1} parent=1 // loop_header
      %s16 = sphi 0, %s20
      %p17 = scmp.ge.s32.totalorder %s16, 4
      %s26 = sphi 0, %s28
      %s29 = sphi 0, %s26
      %s30 = sphi 0, %s29
      %s46 = sphi 0, %s30
      %s50 = sphi 0, %s50
      %s52 = sphi 0, %s50
      %s53 = sphi 0, %s52
      %s67 = sphi 0, %s53
      %s71 = sphi 0, %s71
      %s73 = sphi 0, %s71
      %s74 = sphi 0, %s73
      %s88 = sphi 0, %s74
      %s94 = sphi 0, %s96
      %s97 = sphi 0, %s94
      %s98 = sphi 0, %s97
      %s114 = sphi 0, %s98
    $region4: #{tpu_custom_call.1} parent=1 // loop_header_branch
      %19 = sbr.rel (%p17) target = $region8
    $region5: #{tpu_custom_call.1} parent=1 // loop_body
      %s21 = ssub.s32 %s16, 1
      %s22 = ssub.s32 %s16, 2
      %s23 = sadd.s32 %s16, 1
      %s24 = ssub.s32 %s16, %s23
      %p25 = scmp.eq.s32.totalorder %s24, 0
      %s27 = sadd.s32 %s26, 1
      %s28 = scalar_select %p25, %s26, %s27
      %p31 = pneg %p25
      %p32 = scmp.eq.s32.totalorder %s16, 1
      %p33 = por %p31, %p32
      %p34 = scmp.ne.s32.totalorder %s26, %s29
      %p35 = scmp.eq.s32.totalorder %s16, 0
      %p36 = por %p34, %p35
      %p37 = scmp.ne.s32.totalorder %s26, %s29
      %p38 = scmp.eq.s32.totalorder %s21, 1
      %p39 = por %p37, %p38
      %p40 = scmp.ne.s32.totalorder %s29, %s30
      %p41 = scmp.eq.s32.totalorder %s21, 0
      %p42 = por %p40, %p41
      %p43 = scmp.ne.s32.totalorder %s29, %s30
      %p44 = scmp.eq.s32.totalorder %s22, 1
      %p45 = por %p43, %p44
      %p47 = scmp.ne.s32.totalorder %s30, %s46
      %p48 = scmp.eq.s32.totalorder %s22, 0
      %p49 = por %p47, %p48
      %s51 = sadd.s32 %s50, 1
      %p54 = scmp.eq.s32.totalorder %s16, 1
      %p55 = scmp.ne.s32.totalorder %s50, %s52
      %p56 = scmp.eq.s32.totalorder %s16, 0
      %p57 = por %p55, %p56
      %p58 = scmp.ne.s32.totalorder %s50, %s52
      %p59 = scmp.eq.s32.totalorder %s21, 1
      %p60 = por %p58, %p59
      %p61 = scmp.ne.s32.totalorder %s52, %s53
      %p62 = scmp.eq.s32.totalorder %s21, 0
      %p63 = por %p61, %p62
      %p64 = scmp.ne.s32.totalorder %s52, %s53
      %p65 = scmp.eq.s32.totalorder %s22, 1
      %p66 = por %p64, %p65
      %p68 = scmp.ne.s32.totalorder %s53, %s67
      %p69 = scmp.eq.s32.totalorder %s22, 0
      %p70 = por %p68, %p69
      %s72 = sadd.s32 %s71, 1
      %p75 = scmp.eq.s32.totalorder %s16, 1
      %p76 = scmp.ne.s32.totalorder %s71, %s73
      %p77 = scmp.eq.s32.totalorder %s16, 0
      %p78 = por %p76, %p77
      %p79 = scmp.ne.s32.totalorder %s71, %s73
      %p80 = scmp.eq.s32.totalorder %s21, 1
      %p81 = por %p79, %p80
      %p82 = scmp.ne.s32.totalorder %s73, %s74
      %p83 = scmp.eq.s32.totalorder %s21, 0
      %p84 = por %p82, %p83
      %p85 = scmp.ne.s32.totalorder %s73, %s74
      %p86 = scmp.eq.s32.totalorder %s22, 1
      %p87 = por %p85, %p86
      %p89 = scmp.ne.s32.totalorder %s74, %s88
      %p90 = scmp.eq.s32.totalorder %s22, 0
      %p91 = por %p89, %p90
      %s92 = ssub.s32 %s16, %s23
      %p93 = scmp.eq.s32.totalorder %s92, 0
      %s95 = sadd.s32 %s94, 1
      %s96 = scalar_select %p93, %s94, %s95
      %p99 = pneg %p93
      %p100 = scmp.eq.s32.totalorder %s16, 1
      %p101 = por %p99, %p100
      %p102 = scmp.ne.s32.totalorder %s94, %s97
      %p103 = scmp.eq.s32.totalorder %s16, 0
      %p104 = por %p102, %p103
      %p105 = scmp.ne.s32.totalorder %s94, %s97
      %p106 = scmp.eq.s32.totalorder %s21, 1
      %p107 = por %p105, %p106
      %p108 = scmp.ne.s32.totalorder %s97, %s98
      %p109 = scmp.eq.s32.totalorder %s21, 0
      %p110 = por %p108, %p109
      %p111 = scmp.ne.s32.totalorder %s97, %s98
      %p112 = scmp.eq.s32.totalorder %s22, 1
      %p113 = por %p111, %p112
      %p115 = scmp.ne.s32.totalorder %s98, %s114
      %p116 = scmp.eq.s32.totalorder %s22, 0
      %p117 = por %p115, %p116
      %p118 = scmp.le.s32.totalorder 1, %s16
      %p119 = scmp.lt.s32.totalorder %s16, 3
      %p120 = pnand %p118, %p119
      %p121 = pneg %p120
      // Predicated region
      $region9: #{tpu_custom_call.1} parent=5 // pred_check
        _
      $region10: #{tpu_custom_call.1} parent=5 // pred_check_branch
        %123 = sbr.rel (%p120) target = $region12
      $region11: #{tpu_custom_call.1} parent=5 // pred_region
        %s124 = ssub.s32 %s16, 1
        // Predicated region
        $region13: #{tpu_custom_call.1} parent=11 // pred_check
          %p125 = pneg %p63
        $region14: #{tpu_custom_call.1} parent=11 // pred_check_branch
          %127 = sbr.rel (%p125) target = $region16
        $region15: #{tpu_custom_call.1} parent=11 // pred_region
          %129 = vsyncadd [#allocation7], 0
          %s131 = sshll.u32 %s1, 4
          %s132 = int_to_ptr.hbm [resolvable:$true] %s131
          %s133 = sshll.u32 [#allocation6], 4
          %s134 = int_to_ptr.vmem [resolvable:$true] %s133
          %136 = dma.hbm_to_vmem [thread:$0]  %s132, 128, %s134, [#allocation7]
        $region16: #{tpu_custom_call.1} parent=11 // pred_fallthru
          _
        // Predicated region
        $region17: #{tpu_custom_call.1} parent=11 // pred_check
          %p137 = pneg %p84
        $region18: #{tpu_custom_call.1} parent=11 // pred_check_branch
          %139 = sbr.rel (%p137) target = $region20
        $region19: #{tpu_custom_call.1} parent=11 // pred_region
          %141 = vsyncadd [#allocation7], 0
          %s143 = sshll.u32 %s2, 4
          %s144 = int_to_ptr.hbm [resolvable:$true] %s143
          %s145 = sshll.u32 [#allocation8], 4
          %s146 = int_to_ptr.vmem [resolvable:$true] %s145
          %148 = dma.hbm_to_vmem [thread:$0]  %s144, 128, %s146, [#allocation7]
        $region20: #{tpu_custom_call.1} parent=11 // pred_fallthru
          _
      $region12: #{tpu_custom_call.1} parent=5 // pred_fallthru
        _
      %p149 = scmp.lt.s32.totalorder %s16, 2
      // Predicated region
      $region21: #{tpu_custom_call.1} parent=5 // pred_check
        %p150 = pneg %p149
      $region22: #{tpu_custom_call.1} parent=5 // pred_check_branch
        %152 = sbr.rel (%p150) target = $region24
      $region23: #{tpu_custom_call.1} parent=5 // pred_region
        // Predicated region
        $region25: #{tpu_custom_call.1} parent=23 // pred_check
          %p153 = pneg %p36
        $region26: #{tpu_custom_call.1} parent=23 // pred_check_branch
          %155 = sbr.rel (%p153) target = $region28
        $region27: #{tpu_custom_call.1} parent=23 // pred_region
          %s156 = sand.u32 %s26, 1
          %s157 = scalar_lea.sflag [#allocation4], %s156
          %s158 = sand.u32 %s26, 1
          %s159 = smul.addr %s158, 16
          %s160 = scalar_lea.vmem [#allocation3], %s159
          %162 = vsyncadd %s157, 0
          %s163 = smul.addr %s16, 2
          %s164 = smul.addr %s163, 8
          %s165 = scalar_lea.hbm %s0, %s164
          %s167 = sshll.u32 %s165, 4
          %s168 = int_to_ptr.hbm [resolvable:$true] %s167
          %s169 = sshll.u32 %s160, 4
          %s170 = int_to_ptr.vmem [resolvable:$true] %s169
          %172 = dma.hbm_to_vmem [thread:$0]  %s168, 256, %s170, %s157
        $region28: #{tpu_custom_call.1} parent=23 // pred_fallthru
          _
      $region24: #{tpu_custom_call.1} parent=5 // pred_fallthru
        _
      %p173 = scmp.le.s32.totalorder 1, %s16
      %p174 = scmp.lt.s32.totalorder %s16, 3
      %p175 = pnand %p173, %p174
      %p176 = pneg %p175
      // Predicated region
      $region29: #{tpu_custom_call.1} parent=5 // pred_check
        _
      $region30: #{tpu_custom_call.1} parent=5 // pred_check_branch
        %178 = sbr.rel (%p175) target = $region32
      $region31: #{tpu_custom_call.1} parent=5 // pred_region
        %s179 = ssub.s32 %s16, 1
        %s180 = sand.u32 %s29, 1
        %s181 = scalar_lea.sflag [#allocation4], %s180
        %s182 = sand.u32 %s29, 1
        %s183 = smul.addr %s182, 16
        %s184 = scalar_lea.vmem [#allocation3], %s183
        // Predicated region
        $region33: #{tpu_custom_call.1} parent=31 // pred_check
          %p185 = pneg %p42
        $region34: #{tpu_custom_call.1} parent=31 // pred_check_branch
          %187 = sbr.rel (%p185) target = $region36
        $region35: #{tpu_custom_call.1} parent=31 // pred_region
          %189 = dma.done %s181, 256
        $region36: #{tpu_custom_call.1} parent=31 // pred_fallthru
          _
        // Predicated region
        $region37: #{tpu_custom_call.1} parent=31 // pred_check
          %p190 = pneg %p63
        $region38: #{tpu_custom_call.1} parent=31 // pred_check_branch
          %192 = sbr.rel (%p190) target = $region40
        $region39: #{tpu_custom_call.1} parent=31 // pred_region
          %194 = dma.done [#allocation7], 128
        $region40: #{tpu_custom_call.1} parent=31 // pred_fallthru
          _
        // Predicated region
        $region41: #{tpu_custom_call.1} parent=31 // pred_check
          %p195 = pneg %p84
        $region42: #{tpu_custom_call.1} parent=31 // pred_check_branch
          %197 = sbr.rel (%p195) target = $region44
        $region43: #{tpu_custom_call.1} parent=31 // pred_region
          %199 = dma.done [#allocation7], 128
        $region44: #{tpu_custom_call.1} parent=31 // pred_fallthru
          _
        %s200 = sand.u32 %s29, 1
        %s201 = scalar_lea.sflag [#allocation4], %s200
        %s202 = sand.u32 %s29, 1
        %s203 = smul.addr %s202, 16
        %s204 = scalar_lea.vmem [#allocation3], %s203
        %p205 = pneg %p42
        %p206 = pneg %p39
        %p207 = pneg %p63
        %p208 = pneg %p60
        %p209 = pneg %p84
        %p210 = pneg %p81
        %p211 = pneg %p110
        %p212 = pneg %p107
        %s213 = sand.u32 %s97, 1
        %s214 = scalar_lea.sflag [#allocation5], %s213
        %s215 = sand.u32 %s97, 1
        %s216 = smul.addr %s215, 16
        %s217 = scalar_lea.vmem [#allocation9], %s216
        %v218 = vld [vmem:[%s184] sm:$0xff]
        %v219 = vld [vmem:[%s184 + $0x8] sm:$0xff]
        %v220 = vld [vmem:[#allocation6] sm:$0xff]
        %v221 = vld [vmem:[#allocation8] sm:$0xff]
        %222 = vst [vmem:[#allocation2] sm:$0xff] 0.0
        %223 = vst [vmem:[#allocation2 + $0x18] sm:$0xff] 0.0
        %v224 = vlaneseq
        %v225 = vand.u32 %v224, 127
        %v226 = vadd.s32 %v225, 128
        %vm227 = vcmp.lt.s32.totalorder %v225, 0
        %v228 = vsub.s32 0, %v225
        %v229 = vsel %vm227, %v228, %v225
        %v230 = vshrl.u32 %v229, 4
        %v231 = vand.u32 %v229, 15
        %v232 = vsub.s32 0, %v231
        %v233 = vsel %vm227, %v232, %v231
        %vm234 = vcmp.lt.s32.totalorder %v226, 0
        %v235 = vsub.s32 0, %v226
        %v236 = vsel %vm234, %v235, %v226
        %v237 = vshrl.u32 %v236, 4
        %v238 = vand.u32 %v236, 15
        %v239 = vsub.s32 0, %v238
        %v240 = vsel %vm234, %v239, %v238
        %vm241 = vcmp.ne.s32.totalorder %v233, 0
        %vm242 = vcmp.ne.s32.totalorder %v240, 0
        %vm243 = vcmp.lt.s32.totalorder %v233, 0
        %vm244 = vcmp.lt.s32.totalorder %v240, 0
        %vm245 = vmand %vm243, %vm241
        %vm246 = vmand %vm244, %vm242
        %v247 = vadd.s32 %v233, 16
        %v248 = vadd.s32 %v240, 16
        %v249 = vsel %vm245, %v247, %v233
        %v250 = vsel %vm246, %v248, %v240
        %vm251 = vcmp.ge.s32.totalorder %v249, 1
        %vm252 = vcmp.ge.s32.totalorder %v250, 1
        %vm253 = vcmp.lt.s32.totalorder %v249, 15
        %vm254 = vcmp.lt.s32.totalorder %v250, 15
        %255 = vst [vmem:[#allocation2 + $0x8] sm:$0xff] %v218
        %256 = vst [vmem:[#allocation2 + $0x10] sm:$0xff] %v219
        %v257 = vld [vmem:[#allocation2] sm:$0xff]
        %v258 = vld [vmem:[#allocation2 + $0x8] sm:$0xff]
        %v259 = vld [vmem:[#allocation2 + $0x10] sm:$0xff]
        %v260 = vsel %vm251, 1, 0
        %v261 = vsel %vm252, 1, 0
        %vm262 = vcmp.eq.s32.totalorder %v260, 1
        %vm263 = vcmp.eq.s32.totalorder %v261, 1
        %267 = vrot.lane.b32.xlu0 %v257, 17
        %v268 = vpop.permute.xlu0 %267
        %269 = vrot.lane.b32.xlu0 %v258, 17
        %v270 = vpop.permute.xlu0 %269
        %271 = vrot.lane.b32.xlu0 %v259, 17
        %v272 = vpop.permute.xlu0 %271
        %vm273 = vcmask 138240
        %v274 = vsel %vm273, %v268, %v270
        %v275 = vsel %vm273, %v270, %v272
        %v278 = vsel %vm262, %v274, 0.0
        %v279 = vsel %vm263, %v275, 0.0
        %v280 = vsel %vm253, 1, 0
        %v281 = vsel %vm254, 1, 0
        %vm282 = vcmp.eq.s32.totalorder %v280, 1
        %vm283 = vcmp.eq.s32.totalorder %v281, 1
        %284 = vrot.lane.b32.xlu0 %v257, 15
        %v285 = vpop.permute.xlu0 %284
        %286 = vrot.lane.b32.xlu0 %v258, 15
        %v287 = vpop.permute.xlu0 %286
        %288 = vrot.lane.b32.xlu0 %v259, 15
        %v289 = vpop.permute.xlu0 %288
        %vm290 = vcmask 121856
        %v291 = vsel %vm290, %v285, %v287
        %v292 = vsel %vm290, %v287, %v289
        %v295 = vsel %vm282, %v291, 0.0
        %v296 = vsel %vm283, %v292, 0.0
        %297 = vrot.lane.b32.xlu0 %v257, 1
        %v298 = vpop.permute.xlu0 %297
        %299 = vrot.lane.b32.xlu0 %v258, 1
        %v300 = vpop.permute.xlu0 %299
        %301 = vrot.lane.b32.xlu0 %v259, 1
        %v302 = vpop.permute.xlu0 %301
        %vm303 = vcmask 7168
        %v304 = vsel %vm303, %v298, %v300
        %v305 = vsel %vm303, %v300, %v302
        %v308 = vsel %vm262, %v304, 0.0
        %v309 = vsel %vm263, %v305, 0.0
        %v310 = vld [vmem:[#allocation2 + $0x8] sm:$0xff]
        %v311 = vld [vmem:[#allocation2 + $0x10] sm:$0xff]
        %v312 = vld [vmem:[#allocation2 + $0x18] sm:$0xff]
        %316 = vrot.lane.b32.xlu0 %v310, 127
        %v317 = vpop.permute.xlu0 %316
        %318 = vrot.lane.b32.xlu0 %v311, 127
        %v319 = vpop.permute.xlu0 %318
        %320 = vrot.lane.b32.xlu0 %v312, 127
        %v321 = vpop.permute.xlu0 %320
        %vm322 = vcmask 1039360
        %v323 = vsel %vm322, %v317, %v319
        %v324 = vsel %vm322, %v319, %v321
        %v327 = vsel %vm282, %v323, 0.0
        %v328 = vsel %vm283, %v324, 0.0
        %329 = vrot.lane.b32.xlu0 %v310, 113
        %v330 = vpop.permute.xlu0 %329
        %331 = vrot.lane.b32.xlu0 %v311, 113
        %v332 = vpop.permute.xlu0 %331
        %333 = vrot.lane.b32.xlu0 %v312, 113
        %v334 = vpop.permute.xlu0 %333
        %vm335 = vcmask 924672
        %v336 = vsel %vm335, %v330, %v332
        %v337 = vsel %vm335, %v332, %v334
        %v340 = vsel %vm262, %v336, 0.0
        %v341 = vsel %vm263, %v337, 0.0
        %342 = vrot.lane.b32.xlu0 %v310, 111
        %v343 = vpop.permute.xlu0 %342
        %344 = vrot.lane.b32.xlu0 %v311, 111
        %v345 = vpop.permute.xlu0 %344
        %346 = vrot.lane.b32.xlu0 %v312, 111
        %v347 = vpop.permute.xlu0 %346
        %vm348 = vcmask 908288
        %v349 = vsel %vm348, %v343, %v345
        %v350 = vsel %vm348, %v345, %v347
        %v353 = vsel %vm282, %v349, 0.0
        %v354 = vsel %vm283, %v350, 0.0
        %355 = vrot.lane.b32.xlu0 %v257, 16
        %v356 = vpop.permute.xlu0 %355
        %357 = vrot.lane.b32.xlu0 %v258, 16
        %v358 = vpop.permute.xlu0 %357
        %359 = vrot.lane.b32.xlu0 %v259, 16
        %v360 = vpop.permute.xlu0 %359
        %vm361 = vcmask 130048
        %v362 = vsel %vm361, %v356, %v358
        %v363 = vsel %vm361, %v358, %v360
        %366 = vrot.lane.b32.xlu0 %v310, 112
        %v367 = vpop.permute.xlu0 %366
        %368 = vrot.lane.b32.xlu0 %v311, 112
        %v369 = vpop.permute.xlu0 %368
        %370 = vrot.lane.b32.xlu0 %v312, 112
        %v371 = vpop.permute.xlu0 %370
        %vm372 = vcmask 916480
        %v373 = vsel %vm372, %v367, %v369
        %v374 = vsel %vm372, %v369, %v371
        %377 = vmatpush.msra.mxu0 0.0
        %378 = vmatpush.msra.mxu0 0.0
        %379 = vmatpush.msra.mxu0 0.0
        %380 = vmatpush.msra.mxu0 0.0
        %381 = vmatpush.msra.mxu0 0.0
        %382 = vmatpush.msra.mxu0 0.0
        %383 = vmatpush.msra.mxu0 0.0
        %384 = vmatpush.msra.mxu0 %v353
        %385 = vmatpush.msra.mxu0 %v373
        %386 = vmatpush.msra.mxu0 %v340
        %387 = vmatpush.msra.mxu0 %v327
        %388 = vmatpush.msra.mxu0 %v258
        %389 = vmatpush.msra.mxu0 %v308
        %390 = vmatpush.msra.mxu0 %v295
        %391 = vmatpush.msra.mxu0 %v362
        %392 = vmatpush.msra.mxu0 %v278
        %393 = vmatmul.f32.gmra.mxu0 %v220
        %v394 = vpop.f32.mrf.mxu0
        %v395 = vadd.f32 0.0, %v394
        %396 = vdwg.mxu0
        %397 = vmatpush.msra.mxu0 0.0
        %398 = vmatpush.msra.mxu0 0.0
        %399 = vmatpush.msra.mxu0 0.0
        %400 = vmatpush.msra.mxu0 0.0
        %401 = vmatpush.msra.mxu0 0.0
        %402 = vmatpush.msra.mxu0 0.0
        %403 = vmatpush.msra.mxu0 0.0
        %404 = vmatpush.msra.mxu0 %v354
        %405 = vmatpush.msra.mxu0 %v374
        %406 = vmatpush.msra.mxu0 %v341
        %407 = vmatpush.msra.mxu0 %v328
        %408 = vmatpush.msra.mxu0 %v259
        %409 = vmatpush.msra.mxu0 %v309
        %410 = vmatpush.msra.mxu0 %v296
        %411 = vmatpush.msra.mxu0 %v363
        %412 = vmatpush.msra.mxu0 %v279
        %413 = vmatmul.f32.gmra.mxu0 %v220
        %v414 = vpop.f32.mrf.mxu0
        %v415 = vadd.f32 0.0, %v414
        %416 = vdwg.mxu0
        %v417 = vadd.f32 %v395, %v415
        %418 = vadd.xlane.f32.xlu0 %v417
        %v419 = vpop.xlane.xlu0 %418
        %v420 = vmul.f32 %v395, %v395
        %v421 = vmul.f32 %v415, %v415
        %v422 = vadd.f32 %v420, %v421
        %423 = vadd.xlane.f32.xlu0 %v422
        %v424 = vpop.xlane.xlu0 %423
        %v425 = vmul.f32 %v419, 0.00390625
        %v426 = vmul.f32 %v424, 0.00390625
        %v427 = vmul.f32 %v425, %v425
        %v428 = vsub.f32 %v426, %v427
        %v429 = vmax.f32 %v428, 0.0
        %v430 = vsub.f32 %v395, %v425
        %v431 = vsub.f32 %v415, %v425
        %v432 = vadd.f32 %v429, 1e-05
        %v433 = vrsqrt.pop %v432
        %v434 = vmul.f32 %v433, %v432
        %v435 = vmul.f32 %v434, %v433
        %v436 = vmul.f32 0.5, %v435
        %v437 = vsub.f32 1.5, %v436
        %v438 = vmul.f32 %v433, %v437
        %vm439 = vweird.f32 %v432
        %vm440 = vweird.f32 %v433
        %vm441 = vmor %vm439, %vm440
        %v442 = vsel %vm441, %v433, %v438
        %v443 = vmul.f32 %v430, %v442
        %v444 = vmul.f32 %v431, %v442
        %v445 = vmax.f32 %v443, 0.0
        %v446 = vmax.f32 %v444, 0.0
        %447 = vst [vmem:[#allocation2 + $0x8] sm:$0xff] %v445
        %448 = vst [vmem:[#allocation2 + $0x10] sm:$0xff] %v446
        %v449 = vld [vmem:[#allocation2] sm:$0xff]
        %v450 = vld [vmem:[#allocation2 + $0x8] sm:$0xff]
        %v451 = vld [vmem:[#allocation2 + $0x10] sm:$0xff]
        %455 = vrot.lane.b32.xlu0 %v449, 17
        %v456 = vpop.permute.xlu0 %455
        %457 = vrot.lane.b32.xlu0 %v450, 17
        %v458 = vpop.permute.xlu0 %457
        %459 = vrot.lane.b32.xlu0 %v451, 17
        %v460 = vpop.permute.xlu0 %459
        %v461 = vsel %vm273, %v456, %v458
        %v462 = vsel %vm273, %v458, %v460
        %v465 = vsel %vm262, %v461, 0.0
        %v466 = vsel %vm263, %v462, 0.0
        %467 = vrot.lane.b32.xlu0 %v449, 15
        %v468 = vpop.permute.xlu0 %467
        %469 = vrot.lane.b32.xlu0 %v450, 15
        %v470 = vpop.permute.xlu0 %469
        %471 = vrot.lane.b32.xlu0 %v451, 15
        %v472 = vpop.permute.xlu0 %471
        %v473 = vsel %vm290, %v468, %v470
        %v474 = vsel %vm290, %v470, %v472
        %v477 = vsel %vm282, %v473, 0.0
        %v478 = vsel %vm283, %v474, 0.0
        %479 = vrot.lane.b32.xlu0 %v449, 1
        %v480 = vpop.permute.xlu0 %479
        %481 = vrot.lane.b32.xlu0 %v450, 1
        %v482 = vpop.permute.xlu0 %481
        %483 = vrot.lane.b32.xlu0 %v451, 1
        %v484 = vpop.permute.xlu0 %483
        %v485 = vsel %vm303, %v480, %v482
        %v486 = vsel %vm303, %v482, %v484
        %v489 = vsel %vm262, %v485, 0.0
        %v490 = vsel %vm263, %v486, 0.0
        %v491 = vld [vmem:[#allocation2 + $0x8] sm:$0xff]
        %v492 = vld [vmem:[#allocation2 + $0x10] sm:$0xff]
        %v493 = vld [vmem:[#allocation2 + $0x18] sm:$0xff]
        %497 = vrot.lane.b32.xlu0 %v491, 127
        %v498 = vpop.permute.xlu0 %497
        %499 = vrot.lane.b32.xlu0 %v492, 127
        %v500 = vpop.permute.xlu0 %499
        %501 = vrot.lane.b32.xlu0 %v493, 127
        %v502 = vpop.permute.xlu0 %501
        %v503 = vsel %vm322, %v498, %v500
        %v504 = vsel %vm322, %v500, %v502
        %v507 = vsel %vm282, %v503, 0.0
        %v508 = vsel %vm283, %v504, 0.0
        %509 = vrot.lane.b32.xlu0 %v491, 113
        %v510 = vpop.permute.xlu0 %509
        %511 = vrot.lane.b32.xlu0 %v492, 113
        %v512 = vpop.permute.xlu0 %511
        %513 = vrot.lane.b32.xlu0 %v493, 113
        %v514 = vpop.permute.xlu0 %513
        %v515 = vsel %vm335, %v510, %v512
        %v516 = vsel %vm335, %v512, %v514
        %v519 = vsel %vm262, %v515, 0.0
        %v520 = vsel %vm263, %v516, 0.0
        %521 = vrot.lane.b32.xlu0 %v491, 111
        %v522 = vpop.permute.xlu0 %521
        %523 = vrot.lane.b32.xlu0 %v492, 111
        %v524 = vpop.permute.xlu0 %523
        %525 = vrot.lane.b32.xlu0 %v493, 111
        %v526 = vpop.permute.xlu0 %525
        %v527 = vsel %vm348, %v522, %v524
        %v528 = vsel %vm348, %v524, %v526
        %v531 = vsel %vm282, %v527, 0.0
        %v532 = vsel %vm283, %v528, 0.0
        %533 = vrot.lane.b32.xlu0 %v449, 16
        %v534 = vpop.permute.xlu0 %533
        %535 = vrot.lane.b32.xlu0 %v450, 16
        %v536 = vpop.permute.xlu0 %535
        %537 = vrot.lane.b32.xlu0 %v451, 16
        %v538 = vpop.permute.xlu0 %537
        %v539 = vsel %vm361, %v534, %v536
        %v540 = vsel %vm361, %v536, %v538
        %543 = vrot.lane.b32.xlu0 %v491, 112
        %v544 = vpop.permute.xlu0 %543
        %545 = vrot.lane.b32.xlu0 %v492, 112
        %v546 = vpop.permute.xlu0 %545
        %547 = vrot.lane.b32.xlu0 %v493, 112
        %v548 = vpop.permute.xlu0 %547
        %v549 = vsel %vm372, %v544, %v546
        %v550 = vsel %vm372, %v546, %v548
        %553 = vmatpush.msra.mxu0 0.0
        %554 = vmatpush.msra.mxu0 0.0
        %555 = vmatpush.msra.mxu0 0.0
        %556 = vmatpush.msra.mxu0 0.0
        %557 = vmatpush.msra.mxu0 0.0
        %558 = vmatpush.msra.mxu0 0.0
        %559 = vmatpush.msra.mxu0 0.0
        %560 = vmatpush.msra.mxu0 %v531
        %561 = vmatpush.msra.mxu0 %v549
        %562 = vmatpush.msra.mxu0 %v519
        %563 = vmatpush.msra.mxu0 %v507
        %564 = vmatpush.msra.mxu0 %v450
        %565 = vmatpush.msra.mxu0 %v489
        %566 = vmatpush.msra.mxu0 %v477
        %567 = vmatpush.msra.mxu0 %v539
        %568 = vmatpush.msra.mxu0 %v465
        %569 = vmatmul.f32.gmra.mxu0 %v221
        %v570 = vpop.f32.mrf.mxu0
        %v571 = vadd.f32 0.0, %v570
        %572 = vdwg.mxu0
        %573 = vmatpush.msra.mxu0 0.0
        %574 = vmatpush.msra.mxu0 0.0
        %575 = vmatpush.msra.mxu0 0.0
        %576 = vmatpush.msra.mxu0 0.0
        %577 = vmatpush.msra.mxu0 0.0
        %578 = vmatpush.msra.mxu0 0.0
        %579 = vmatpush.msra.mxu0 0.0
        %580 = vmatpush.msra.mxu0 %v532
        %581 = vmatpush.msra.mxu0 %v550
        %582 = vmatpush.msra.mxu0 %v520
        %583 = vmatpush.msra.mxu0 %v508
        %584 = vmatpush.msra.mxu0 %v451
        %585 = vmatpush.msra.mxu0 %v490
        %586 = vmatpush.msra.mxu0 %v478
        %587 = vmatpush.msra.mxu0 %v540
        %588 = vmatpush.msra.mxu0 %v466
        %589 = vmatmul.f32.gmra.mxu0 %v221
        %v590 = vpop.f32.mrf.mxu0
        %v591 = vadd.f32 0.0, %v590
        %592 = vdwg.mxu0
        %v593 = vadd.f32 %v571, %v591
        %594 = vadd.xlane.f32.xlu0 %v593
        %v595 = vpop.xlane.xlu0 %594
        %v596 = vmul.f32 %v571, %v571
        %v597 = vmul.f32 %v591, %v591
        %v598 = vadd.f32 %v596, %v597
        %599 = vadd.xlane.f32.xlu0 %v598
        %v600 = vpop.xlane.xlu0 %599
        %v601 = vmul.f32 %v595, 0.00390625
        %v602 = vmul.f32 %v600, 0.00390625
        %v603 = vmul.f32 %v601, %v601
        %v604 = vsub.f32 %v602, %v603
        %v605 = vmax.f32 %v604, 0.0
        %v606 = vsub.f32 %v571, %v601
        %v607 = vsub.f32 %v591, %v601
        %v608 = vadd.f32 %v605, 1e-05
        %v609 = vrsqrt.pop %v608
        %v610 = vmul.f32 %v609, %v608
        %v611 = vmul.f32 %v610, %v609
        %v612 = vmul.f32 0.5, %v611
        %v613 = vsub.f32 1.5, %v612
        %v614 = vmul.f32 %v609, %v613
        %vm615 = vweird.f32 %v608
        %vm616 = vweird.f32 %v609
        %vm617 = vmor %vm615, %vm616
        %v618 = vsel %vm617, %v609, %v614
        %v619 = vmul.f32 %v606, %v618
        %v620 = vmul.f32 %v607, %v618
        %v621 = vadd.f32 %v218, %v619
        %v622 = vadd.f32 %v219, %v620
        %623 = vst [vmem:[%s217] sm:$0xff] %v621
        %624 = vst [vmem:[%s217 + $0x8] sm:$0xff] %v622
        %s625 = sand.u32 %s97, 1
        %s626 = scalar_lea.sflag [#allocation5], %s625
        %s627 = sand.u32 %s97, 1
        %s628 = smul.addr %s627, 16
        %s629 = scalar_lea.vmem [#allocation9], %s628
        // Predicated region
        $region45: #{tpu_custom_call.1} parent=31 // pred_check
          %p630 = pneg %p107
        $region46: #{tpu_custom_call.1} parent=31 // pred_check_branch
          %632 = sbr.rel (%p630) target = $region48
        $region47: #{tpu_custom_call.1} parent=31 // pred_region
          %634 = vsyncadd %s626, 0
          %s635 = smul.addr %s21, 2
          %s636 = smul.addr %s635, 8
          %s637 = scalar_lea.hbm %s3, %s636
          %s639 = sshll.u32 %s629, 4
          %s640 = int_to_ptr.vmem [resolvable:$true] %s639
          %s641 = sshll.u32 %s637, 4
          %s642 = int_to_ptr.hbm [resolvable:$true] %s641
          %644 = dma.vmem_to_hbm [thread:$0]  %s640, 256, %s642, %s626
        $region48: #{tpu_custom_call.1} parent=31 // pred_fallthru
          _
      $region32: #{tpu_custom_call.1} parent=5 // pred_fallthru
        _
      %p645 = scmp.le.s32.totalorder 2, %s16
      // Predicated region
      $region49: #{tpu_custom_call.1} parent=5 // pred_check
        %p646 = pneg %p645
      $region50: #{tpu_custom_call.1} parent=5 // pred_check_branch
        %648 = sbr.rel (%p646) target = $region52
      $region51: #{tpu_custom_call.1} parent=5 // pred_region
        %s649 = ssub.s32 %s16, 2
        // Predicated region
        $region53: #{tpu_custom_call.1} parent=51 // pred_check
          %p650 = pneg %p113
        $region54: #{tpu_custom_call.1} parent=51 // pred_check_branch
          %652 = sbr.rel (%p650) target = $region56
        $region55: #{tpu_custom_call.1} parent=51 // pred_region
          %s653 = sand.u32 %s98, 1
          %s654 = scalar_lea.sflag [#allocation5], %s653
          %s655 = sand.u32 %s98, 1
          %s656 = smul.addr %s655, 16
          %s657 = scalar_lea.vmem [#allocation9], %s656
          %659 = dma.done %s654, 256
        $region56: #{tpu_custom_call.1} parent=51 // pred_fallthru
          _
      $region52: #{tpu_custom_call.1} parent=5 // pred_fallthru
        _
    $region6: #{tpu_custom_call.1} parent=1 // loop_footer
      %s20 = sadd.s32 1, %s16
    $region7: #{tpu_custom_call.1} parent=1 // loop_footer_branch
      %15 = sbr.rel target = $region3
    $region8: #{tpu_custom_call.1} parent=1 // loop_exit
      _
    %660 = vsyncpa [#allocation4], 1
    %s661 = scalar_lea.sflag [#allocation4], 1
    %662 = vsyncpa %s661, 1
    %663 = vsyncpa [#allocation7], 1
    %664 = vsyncpa [#allocation5], 1
    %s665 = scalar_lea.sflag [#allocation5], 1
    %666 = vsyncpa %s665, 1

</llo_original>
